<compile_context>
chip_gen: v7x
topology: tpu7x:2x2x1
jax: 0.10.0
libtpu: 0.0.40
codegen_flags: <defaults>
</compile_context>

<pallas_src>
import jax
import jax.numpy as jnp
from jax.experimental import pallas as pl
from jax.experimental.pallas import tpu as pltpu

_LANE = 128   # lane width: pad matmul feature dims to a multiple of this
_BTILE = 128  # minimum batch tile (keeps every tile (8,128)/bf16-pack aligned)

# "NT" matmul dims: A (M, K) . B (N, K)^T -> (M, N)  (same pattern as q @ k^T
# in the TPU flash-attention kernel, so the Mosaic lowering is well-trodden).
_NT_DIMS = (((1,), (1,)), ((), ()))


def _round_up(x, m):
    return ((x + m - 1) // m) * m


def _linear_block_kernel(x_ref, w1_ref, b1_ref, w2_ref, b2_ref, w3t_ref, b3t_ref,
                         o_ref):
    # Fused chain of 3 Linear layers on one batch tile, entirely in VMEM.
    # bf16 operands on the MXU, f32 accumulation; bias adds run on the VPU
    # (free filler under the memory-bound roof).
    x = x_ref[...]                                             # (TB, L_p) bf16
    h = jnp.dot(x, w1_ref[...],
                preferred_element_type=jnp.float32) + b1_ref[...]
    h = jnp.dot(h.astype(jnp.bfloat16), w2_ref[...],
                preferred_element_type=jnp.float32) + b2_ref[...]
    # Third layer emitted transposed: (h_t, n1_p) . (TB, n1_p)^T -> (h_t, TB).
    # The output block therefore has batch on lanes (lane-dense f32 stores)
    # and only h_t (= round_up(horizon, 16)) rows -> ~8x less HBM writeback
    # than a (TB, 128)-padded f32 output when horizon << 128.
    o_t = jax.lax.dot_general(w3t_ref[...], h.astype(jnp.bfloat16),
                              _NT_DIMS, preferred_element_type=jnp.float32)
    o_ref[...] = o_t + b3t_ref[...]


def prepare_params(params):
    """One-time param prep (hoisted out of the hot path, per perf review).

    Pads feature dims to lane multiples, casts weights to bf16, and stores the
    third layer transposed so the kernel can emit a compact transposed output.
    Zero padding is exact: padded rows/cols contribute nothing to true outputs.
    """
    w1, b1 = params["w1"], params["b1"]
    w2, b2 = params["w2"], params["b2"]
    w3, b3 = params["w3"], params["b3"]
    L_in, n0 = w1.shape
    n1 = w2.shape[1]
    horizon = w3.shape[1]

    L_p = _round_up(L_in, _LANE)
    n0_p = _round_up(n0, _LANE)
    n1_p = _round_up(n1, _LANE)
    h_t = _round_up(horizon, 16)   # sublane dim of the transposed output block

    w1p = jnp.zeros((L_p, n0_p), jnp.bfloat16).at[:L_in, :n0].set(
        w1.astype(jnp.bfloat16))
    w2p = jnp.zeros((n0_p, n1_p), jnp.bfloat16).at[:n0, :n1].set(
        w2.astype(jnp.bfloat16))
    w3t = jnp.zeros((h_t, n1_p), jnp.bfloat16).at[:horizon, :n1].set(
        w3.T.astype(jnp.bfloat16))
    b1p = jnp.zeros((1, n0_p), jnp.float32).at[:, :n0].set(b1.astype(jnp.float32))
    b2p = jnp.zeros((1, n1_p), jnp.float32).at[:, :n1].set(b2.astype(jnp.float32))
    b3t = jnp.zeros((h_t, 1), jnp.float32).at[:horizon, :].set(
        b3.astype(jnp.float32).T)

    return {
        "w1": w1p, "b1": b1p, "w2": w2p, "b2": b2p, "w3t": w3t, "b3t": b3t,
        "dims": (int(L_in), int(n0), int(n1), int(horizon)),
    }


def linear_block_forward(x, prepped, *, batch_tile=512):
    """x: (B, C, L) float32. prepped: output of prepare_params()."""
    L_in, n0, n1, horizon = prepped["dims"]
    w1p, b1p = prepped["w1"], prepped["b1"]
    w2p, b2p = prepped["w2"], prepped["b2"]
    w3t, b3t = prepped["w3t"], prepped["b3t"]
    L_p, n0_p = w1p.shape
    n1_p = w2p.shape[1]
    h_t = w3t.shape[0]

    B = x.shape[0]
    x2d = x.reshape(B, -1)                       # nn.Flatten(start_dim=1)
    assert x2d.shape[1] == L_in

    # ---- VMEM budget: cap against the physical per-core capacity (v7x has
    #      only 64 MiB/TC; v5e/v6e have 128 MiB), leaving compiler headroom.
    try:
        phys_vmem = int(pltpu.get_tpu_info().vmem_capacity_bytes)
    except Exception:
        phys_vmem = 64 * 2**20                   # conservative v7x-sized fallback
    vmem_cap = min(int(phys_vmem * 0.85), 100 * 2**20)

    def _est_vmem_bytes(tb):
        # Conservative: assume double-buffering on every pipelined operand.
        return (
            2 * tb * L_p * 2                                        # x tiles (bf16)
            + 2 * h_t * tb * 4                                      # out tiles (f32)
            + 2 * ((L_p * n0_p + n0_p * n1_p + h_t * n1_p) * 2      # bf16 weights
                   + (n0_p + n1_p + h_t) * 4)                       # f32 biases
            + tb * (n0_p + n1_p) * 6                                # intermediates
        )

    # ---- batch tile selection.  TB is always a multiple of 128 so every
    #      block (x, output-transposed) is (8,128)/bf16-pack aligned and the
    #      output stores stay lane-dense.
    batch_tile = max(256, _round_up(batch_tile, 256))
    if B <= batch_tile:
        TB = _round_up(B, _BTILE)
    else:
        TB = batch_tile
    # v7x has 2 TensorCores: make sure the "parallel" batch axis has >= 2 grid
    # steps when the tile can be split cleanly (half must stay a multiple of 128).
    if _round_up(B, TB) == TB and TB >= 256 and TB % 256 == 0:
        TB //= 2
    # Shrink TB until the estimated VMEM footprint fits the per-core budget.
    while _est_vmem_bytes(TB) > vmem_cap and TB >= 256 and TB % 256 == 0:
        TB //= 2
    # TODO(synk): if the resident bf16 weights alone approach the VMEM cap
    # (very large L_in / n0 / n1), add a trailing K grid axis ('arbitrary')
    # with an f32 VMEM accumulator instead of keeping whole weights resident.

    B_pad = _round_up(B, TB)
    n_tiles = B_pad // TB

    # ---- x tile: bf16 (halves input HBM traffic; MXU consumes bf16 anyway).
    #      Skip the zero-pad copy entirely when no padding is needed.
    if (B_pad != B) or (L_p != L_in):
        x_p = jnp.zeros((B_pad, L_p), jnp.bfloat16).at[:B, :L_in].set(
            x2d.astype(jnp.bfloat16))
    else:
        x_p = x2d.astype(jnp.bfloat16)

    in_specs = [
        pl.BlockSpec((TB, L_p), lambda i: (i, 0)),      # x tile: pipelined per step
        pl.BlockSpec((L_p, n0_p), lambda i: (0, 0)),    # weights/biases: constant
        pl.BlockSpec((1, n0_p), lambda i: (0, 0)),      # index -> stay resident in
        pl.BlockSpec((n0_p, n1_p), lambda i: (0, 0)),   # VMEM across the grid
        pl.BlockSpec((1, n1_p), lambda i: (0, 0)),
        pl.BlockSpec((h_t, n1_p), lambda i: (0, 0)),
        pl.BlockSpec((h_t, 1), lambda i: (0, 0)),
    ]
    out_specs = pl.BlockSpec((h_t, TB), lambda i: (0, i))   # transposed output

    vmem_limit = int(min(vmem_cap, max(16 * 2**20, 2 * _est_vmem_bytes(TB))))

    # CostEstimate reflects real padded tile traffic (bf16 x + bf16 weights +
    # f32 biases + compact transposed f32 output).
    flops = 2 * B_pad * (L_p * n0_p + n0_p * n1_p + n1_p * h_t)
    bytes_accessed = (
        B_pad * L_p * 2
        + (L_p * n0_p + n0_p * n1_p + h_t * n1_p) * 2
        + (n0_p + n1_p + h_t) * 4
        + h_t * B_pad * 4
    )

    out_t = pl.pallas_call(
        _linear_block_kernel,
        out_shape=jax.ShapeDtypeStruct((h_t, B_pad), jnp.float32),
        grid=(n_tiles,),
        in_specs=in_specs,
        out_specs=out_specs,
        compiler_params=pltpu.CompilerParams(
            dimension_semantics=("parallel",),   # batch axis: megacore-shardable
            vmem_limit_bytes=vmem_limit,
        ),
        cost_estimate=pl.CostEstimate(
            flops=flops, transcendentals=0, bytes_accessed=bytes_accessed),
    )(x_p, w1p, b1p, w2p, b2p, w3t, b3t)

    # Undo transpose + padding (tiny wrapper-side glue on a (horizon, B) slab).
    return out_t[:horizon, :B].T


def init_params(key, L_in, neurons, horizon):
    """Deterministic synthetic init matching nn.Linear shapes.

    PyTorch stores weight as (out, in); we keep the transposed (in, out) form
    so y = x @ W + b directly.
    """
    dims = [L_in] + list(neurons) + [horizon]
    params = {}
    for idx in range(len(dims) - 1):
        fan_in, fan_out = dims[idx], dims[idx + 1]
        key, kw, kb = jax.random.split(key, 3)
        bound = 1.0 / jnp.sqrt(fan_in)
        params[f"w{idx + 1}"] = jax.random.uniform(
            kw, (fan_in, fan_out), jnp.float32, -bound, bound)
        params[f"b{idx + 1}"] = jax.random.uniform(
            kb, (1, fan_out), jnp.float32, -bound, bound)
    return params


def linear_block_ref(x, params):
    """Pure-JAX f32 reference of the same forward pass."""
    h = x.reshape(x.shape[0], -1)
    h = h @ params["w1"] + params["b1"]
    h = h @ params["w2"] + params["b2"]
    return h @ params["w3"] + params["b3"]


if __name__ == "__main__":
    # Small shapes consistent with the module: batch=2, channels=4, seq=16.
    B, C, L = 2, 4, 16
    L_in = C * L            # 64, after Flatten(start_dim=1)
    neurons = [32, 32]      # conv_layers=2 -> two hidden Linear layers
    horizon = 8

    key = jax.random.PRNGKey(0)
    key, kx = jax.random.split(key)
    x = jax.random.normal(kx, (B, C, L), dtype=jnp.float32)

    params = init_params(key, L_in, neurons, horizon)
    prepped = prepare_params(params)      # one-time: hoisted out of the hot path

    out = linear_block_forward(x, prepped)
    out = jax.block_until_ready(out)

    ref = linear_block_ref(x, params)
    assert out.shape == (B, horizon), out.shape
    # bf16 x / weights / inter-layer activations (f32 accumulation, f32 output)
    # -> loosened tolerance vs. the f32 reference.  If strict f32 parity with
    # the PyTorch module is required, keep f32 operands (kernel is HBM-bound,
    # so the extra MXU cost is hidden).
    assert jnp.allclose(out, ref, atol=5e-2, rtol=5e-2), float(
        jnp.max(jnp.abs(out - ref)))

    print("KERNEL_OK")
</pallas_src>

<mosaic_0001>
module attributes {stable_mosaic.version = 11 : i64} {
  func.func @_linear_block_kernel(%arg0: i32, %arg1: memref<128x128xbf16, #tpu.memory_space<vmem>>, %arg2: memref<128x128xbf16, #tpu.memory_space<vmem>>, %arg3: memref<1x128xf32, #tpu.memory_space<vmem>>, %arg4: memref<128x128xbf16, #tpu.memory_space<vmem>>, %arg5: memref<1x128xf32, #tpu.memory_space<vmem>>, %arg6: memref<16x128xbf16, #tpu.memory_space<vmem>>, %arg7: memref<16x1xf32, #tpu.memory_space<vmem>>, %arg8: memref<16x128xf32, #tpu.memory_space<vmem>>) attributes {dimension_semantics = [#tpu.dimension_semantics<parallel>], iteration_bounds = array<i64: 1>, scalar_prefetch = 0 : i64, scratch_operands = 0 : i64, tpu.core_type = #tpu.core_type<tc>, window_params = [{transform_indices = @transform_0, window_bounds = array<i64: 128, 128>}, {pipeline_mode = #tpu.pipeline_mode<synchronous>, transform_indices = @transform_1, window_bounds = array<i64: 128, 128>}, {pipeline_mode = #tpu.pipeline_mode<synchronous>, transform_indices = @transform_2, window_bounds = array<i64: 1, 128>}, {pipeline_mode = #tpu.pipeline_mode<synchronous>, transform_indices = @transform_3, window_bounds = array<i64: 128, 128>}, {pipeline_mode = #tpu.pipeline_mode<synchronous>, transform_indices = @transform_4, window_bounds = array<i64: 1, 128>}, {pipeline_mode = #tpu.pipeline_mode<synchronous>, transform_indices = @transform_5, window_bounds = array<i64: 16, 128>}, {pipeline_mode = #tpu.pipeline_mode<synchronous>, transform_indices = @transform_6, window_bounds = array<i64: 16, 1>}, {transform_indices = @transform_7, window_bounds = array<i64: 16, 128>}]} {
    %c0 = arith.constant 0 : index
    %c0_0 = arith.constant 0 : index
    %0 = vector.load %arg1[%c0, %c0_0] : memref<128x128xbf16, #tpu.memory_space<vmem>>, vector<128x128xbf16>
    %c0_1 = arith.constant 0 : index
    %c0_2 = arith.constant 0 : index
    %1 = vector.load %arg2[%c0_1, %c0_2] : memref<128x128xbf16, #tpu.memory_space<vmem>>, vector<128x128xbf16>
    %cst = arith.constant dense<0.000000e+00> : vector<128x128xf32>
    %2 = tpu.matmul %0, %1, %cst {dimension_numbers = #tpu.dot_dimension_numbers<[1], [0], [0], [1], [0, 0, 1, 1], [], []>} : vector<128x128xbf16>, vector<128x128xbf16>, vector<128x128xf32> -> vector<128x128xf32>
    %c0_3 = arith.constant 0 : index
    %c0_4 = arith.constant 0 : index
    %3 = vector.load %arg3[%c0_3, %c0_4] : memref<1x128xf32, #tpu.memory_space<vmem>>, vector<1x128xf32>
    %4 = vector.broadcast %3 : vector<1x128xf32> to vector<128x128xf32>
    %5 = arith.addf %2, %4 : vector<128x128xf32>
    %6 = arith.truncf %5 : vector<128x128xf32> to vector<128x128xbf16>
    %c0_5 = arith.constant 0 : index
    %c0_6 = arith.constant 0 : index
    %7 = vector.load %arg4[%c0_5, %c0_6] : memref<128x128xbf16, #tpu.memory_space<vmem>>, vector<128x128xbf16>
    %cst_7 = arith.constant dense<0.000000e+00> : vector<128x128xf32>
    %8 = tpu.matmul %6, %7, %cst_7 {dimension_numbers = #tpu.dot_dimension_numbers<[1], [0], [0], [1], [0, 0, 1, 1], [], []>} : vector<128x128xbf16>, vector<128x128xbf16>, vector<128x128xf32> -> vector<128x128xf32>
    %c0_8 = arith.constant 0 : index
    %c0_9 = arith.constant 0 : index
    %9 = vector.load %arg5[%c0_8, %c0_9] : memref<1x128xf32, #tpu.memory_space<vmem>>, vector<1x128xf32>
    %10 = vector.broadcast %9 : vector<1x128xf32> to vector<128x128xf32>
    %11 = arith.addf %8, %10 : vector<128x128xf32>
    %c0_10 = arith.constant 0 : index
    %c0_11 = arith.constant 0 : index
    %12 = vector.load %arg6[%c0_10, %c0_11] : memref<16x128xbf16, #tpu.memory_space<vmem>>, vector<16x128xbf16>
    %13 = arith.truncf %11 : vector<128x128xf32> to vector<128x128xbf16>
    %cst_12 = arith.constant dense<0.000000e+00> : vector<16x128xf32>
    %14 = tpu.matmul %12, %13, %cst_12 {dimension_numbers = #tpu.dot_dimension_numbers<[1], [1], [0], [0], [0, 0, 1, 0], [], []>} : vector<16x128xbf16>, vector<128x128xbf16>, vector<16x128xf32> -> vector<16x128xf32>
    %c0_13 = arith.constant 0 : index
    %c0_14 = arith.constant 0 : index
    %15 = vector.load %arg7[%c0_13, %c0_14] : memref<16x1xf32, #tpu.memory_space<vmem>>, vector<16x1xf32>
    %16 = vector.broadcast %15 : vector<16x1xf32> to vector<16x128xf32>
    %17 = arith.addf %14, %16 : vector<16x128xf32>
    %c0_15 = arith.constant 0 : index
    %c0_16 = arith.constant 0 : index
    %18 = vector.load %arg8[%c0_15, %c0_16] : memref<16x128xf32, #tpu.memory_space<vmem>>, vector<16x128xf32>
    tpu.vector_store %arg8[%c0_15, %c0_16], %17 {strides = array<i32>} : memref<16x128xf32, #tpu.memory_space<vmem>>, vector<16x128xf32>,
    return
  }
  func.func @transform_0(%arg0: i32) -> (i32, i32) {
    %c0_i32 = arith.constant 0 : i32
    %c0_i32_0 = arith.constant 0 : i32
    return %arg0, %c0_i32 : i32, i32
  }
  func.func @transform_1(%arg0: i32) -> (i32, i32) {
    %c0_i32 = arith.constant 0 : i32
    %c0_i32_0 = arith.constant 0 : i32
    %c0_i32_1 = arith.constant 0 : i32
    return %c0_i32, %c0_i32_0 : i32, i32
  }
  func.func @transform_2(%arg0: i32) -> (i32, i32) {
    %c0_i32 = arith.constant 0 : i32
    %c0_i32_0 = arith.constant 0 : i32
    %c0_i32_1 = arith.constant 0 : i32
    return %c0_i32, %c0_i32_0 : i32, i32
  }
  func.func @transform_3(%arg0: i32) -> (i32, i32) {
    %c0_i32 = arith.constant 0 : i32
    %c0_i32_0 = arith.constant 0 : i32
    %c0_i32_1 = arith.constant 0 : i32
    return %c0_i32, %c0_i32_0 : i32, i32
  }
  func.func @transform_4(%arg0: i32) -> (i32, i32) {
    %c0_i32 = arith.constant 0 : i32
    %c0_i32_0 = arith.constant 0 : i32
    %c0_i32_1 = arith.constant 0 : i32
    return %c0_i32, %c0_i32_0 : i32, i32
  }
  func.func @transform_5(%arg0: i32) -> (i32, i32) {
    %c0_i32 = arith.constant 0 : i32
    %c0_i32_0 = arith.constant 0 : i32
    %c0_i32_1 = arith.constant 0 : i32
    return %c0_i32, %c0_i32_0 : i32, i32
  }
  func.func @transform_6(%arg0: i32) -> (i32, i32) {
    %c0_i32 = arith.constant 0 : i32
    %c0_i32_0 = arith.constant 0 : i32
    %c0_i32_1 = arith.constant 0 : i32
    return %c0_i32, %c0_i32_0 : i32, i32
  }
  func.func @transform_7(%arg0: i32) -> (i32, i32) {
    %c0_i32 = arith.constant 0 : i32
    %c0_i32_0 = arith.constant 0 : i32
    return %c0_i32, %arg0 : i32, i32
  }
}

</mosaic_0001>

<llo_original>
// kernel: tpu_custom_call.1
$region0: #{tpu_custom_call.1}
  #allocation0 [shape = 'u32[]', space=smem, size = 0x4, offset = 0x4, fixed_abs, tag = 'smem constant byte address 0x4 - core index']
  #allocation1 [shape = 'u32[144,128]{1,0:T(1,128)}', space=vmem, size = 0x12000, scoped, tag = 'internal scratch']
  %s0 = inlined_call_operand.hbm [shape: bf16[128,128], index: 0, kind: input, shape index: {}]
  %s1 = inlined_call_operand.hbm [shape: bf16[128,128], index: 1, kind: input, shape index: {}]
  %s2 = inlined_call_operand.vmem [shape: f32[1,128], index: 2, kind: input, shape index: {}]
  %s3 = inlined_call_operand.hbm [shape: bf16[128,128], index: 3, kind: input, shape index: {}]
  %s4 = inlined_call_operand.vmem [shape: f32[1,128], index: 4, kind: input, shape index: {}]
  %s5 = inlined_call_operand.vmem [shape: bf16[16,128], index: 5, kind: input, shape index: {}]
  %s6 = inlined_call_operand.vmem [shape: f32[16,1], index: 6, kind: input, shape index: {}]
  %s7 = inlined_call_operand.hbm [shape: f32[16,128], index: 7, kind: output, shape index: {}]
  %s8 = sld [smem:[#allocation0]]
  $region50: #{tpu_custom_call.1} parent=0
    _
  %s10 = ssub.s32 1, %s8
  %s11 = scalar_select 0, %s10, %s8
  $region1: #{tpu_custom_call.1} parent=0
    #allocation2 [shape = 'u8[32768]{0}', space=vmem, size = 0x8000, scoped, tag = 'input window, operand 0, single buffered']
    #allocation3 [shape = 's32[1]{0}', space=sflag, size = 0x4, scoped, tag = 'scoped memory for tpu_custom_call.1']
    #allocation4 [shape = 's32[1]{0}', space=sflag, size = 0x4, scoped, tag = 'scoped memory for tpu_custom_call.1']
    #allocation5 [shape = 'u8[32768]{0}', space=vmem, size = 0x8000, scoped, tag = 'input window, operand 1, single buffered']
    #allocation6 [shape = 's32[1]{0}', space=sflag, size = 0x4, scoped, tag = 'scoped memory for tpu_custom_call.1']
    #allocation7 [shape = 'u8[32768]{0}', space=vmem, size = 0x8000, scoped, tag = 'input window, operand 3, single buffered']
    #allocation8 [shape = 'u8[8192]{0}', space=vmem, size = 0x2000, scoped, tag = 'output window, operand 0, single buffered']
    %12 = vsyncpa [#allocation3], 0
    %13 = vsyncpa [#allocation6], 0
    %14 = vsyncpa [#allocation4], 0
    // Predicated region
    $region2: #{tpu_custom_call.1} parent=1 // pred_check
      _
    $region3: #{tpu_custom_call.1} parent=1 // pred_check_branch
      %16 = sbr.rel (0) target = $region5
    $region4: #{tpu_custom_call.1} parent=1 // pred_region
      %s18 = ssub.s32 1024, 1024
      %19 = vsyncadd [#allocation3], %s18
      %s20 = sshll.u32 [#allocation2], 4
      %s21 = int_to_ptr.vmem [resolvable:$true] %s20
      %26 = dma.hbm_to_vmem [thread:$0]  %s0, 1024, %s21, [#allocation3], 64, 64, 4
    $region5: #{tpu_custom_call.1} parent=1 // pred_fallthru
      _
    // Predicated region
    $region6: #{tpu_custom_call.1} parent=1 // pred_check
      _
    $region7: #{tpu_custom_call.1} parent=1 // pred_check_branch
      %28 = sbr.rel (0) target = $region9
    $region8: #{tpu_custom_call.1} parent=1 // pred_region
      %s30 = ssub.s32 1024, 1024
      %31 = vsyncadd [#allocation6], %s30
      %s32 = sshll.u32 [#allocation5], 4
      %s33 = int_to_ptr.vmem [resolvable:$true] %s32
      %38 = dma.hbm_to_vmem [thread:$0]  %s1, 1024, %s33, [#allocation6], 64, 64, 4
    $region9: #{tpu_custom_call.1} parent=1 // pred_fallthru
      _
    // Predicated region
    $region10: #{tpu_custom_call.1} parent=1 // pred_check
      _
    $region11: #{tpu_custom_call.1} parent=1 // pred_check_branch
      %40 = sbr.rel (0) target = $region13
    $region12: #{tpu_custom_call.1} parent=1 // pred_region
      _
    $region13: #{tpu_custom_call.1} parent=1 // pred_fallthru
      _
    // Predicated region
    $region14: #{tpu_custom_call.1} parent=1 // pred_check
      _
    $region15: #{tpu_custom_call.1} parent=1 // pred_check_branch
      %42 = sbr.rel (0) target = $region17
    $region16: #{tpu_custom_call.1} parent=1 // pred_region
      %s44 = ssub.s32 1024, 1024
      %45 = vsyncadd [#allocation6], %s44
      %s46 = sshll.u32 [#allocation7], 4
      %s47 = int_to_ptr.vmem [resolvable:$true] %s46
      %52 = dma.hbm_to_vmem [thread:$0]  %s3, 1024, %s47, [#allocation6], 64, 64, 4
    $region17: #{tpu_custom_call.1} parent=1 // pred_fallthru
      _
    // Predicated region
    $region18: #{tpu_custom_call.1} parent=1 // pred_check
      _
    $region19: #{tpu_custom_call.1} parent=1 // pred_check_branch
      %54 = sbr.rel (0) target = $region21
    $region20: #{tpu_custom_call.1} parent=1 // pred_region
      _
    $region21: #{tpu_custom_call.1} parent=1 // pred_fallthru
      _
    // Predicated region
    $region22: #{tpu_custom_call.1} parent=1 // pred_check
      _
    $region23: #{tpu_custom_call.1} parent=1 // pred_check_branch
      %56 = sbr.rel (0) target = $region25
    $region24: #{tpu_custom_call.1} parent=1 // pred_region
      _
    $region25: #{tpu_custom_call.1} parent=1 // pred_fallthru
      _
    // Predicated region
    $region26: #{tpu_custom_call.1} parent=1 // pred_check
      _
    $region27: #{tpu_custom_call.1} parent=1 // pred_check_branch
      %58 = sbr.rel (0) target = $region29
    $region28: #{tpu_custom_call.1} parent=1 // pred_region
      _
    $region29: #{tpu_custom_call.1} parent=1 // pred_fallthru
      _
    // Predicated region
    $region30: #{tpu_custom_call.1} parent=1 // pred_check
      _
    $region31: #{tpu_custom_call.1} parent=1 // pred_check_branch
      %60 = sbr.rel (0) target = $region33
    $region32: #{tpu_custom_call.1} parent=1 // pred_region
      %61 = dma.done [#allocation3], 1024
    $region33: #{tpu_custom_call.1} parent=1 // pred_fallthru
      _
    // Predicated region
    $region34: #{tpu_custom_call.1} parent=1 // pred_check
      _
    $region35: #{tpu_custom_call.1} parent=1 // pred_check_branch
      %63 = sbr.rel (0) target = $region37
    $region36: #{tpu_custom_call.1} parent=1 // pred_region
      %64 = dma.done [#allocation6], 1024
    $region37: #{tpu_custom_call.1} parent=1 // pred_fallthru
      _
    // Predicated region
    $region38: #{tpu_custom_call.1} parent=1 // pred_check
      _
    $region39: #{tpu_custom_call.1} parent=1 // pred_check_branch
      %66 = sbr.rel (0) target = $region41
    $region40: #{tpu_custom_call.1} parent=1 // pred_region
      %67 = dma.done [#allocation6], 1024
    $region41: #{tpu_custom_call.1} parent=1 // pred_fallthru
      _
    %v69 = vld [vmem:[#allocation2] sm:$0xf]
    %v70 = vld [vmem:[#allocation2 + $0x4] sm:$0xf]
    %v71 = vld [vmem:[#allocation2 + $0x8] sm:$0xf]
    %v72 = vld [vmem:[#allocation2 + $0xc] sm:$0xf]
    %v73 = vld [vmem:[#allocation2 + $0x10] sm:$0xf]
    %v74 = vld [vmem:[#allocation2 + $0x14] sm:$0xf]
    %v75 = vld [vmem:[#allocation2 + $0x18] sm:$0xf]
    %v76 = vld [vmem:[#allocation2 + $0x1c] sm:$0xf]
    %v77 = vld [vmem:[#allocation2 + $0x20] sm:$0xf]
    %v78 = vld [vmem:[#allocation2 + $0x24] sm:$0xf]
    %v79 = vld [vmem:[#allocation2 + $0x28] sm:$0xf]
    %v80 = vld [vmem:[#allocation2 + $0x2c] sm:$0xf]
    %v81 = vld [vmem:[#allocation2 + $0x30] sm:$0xf]
    %v82 = vld [vmem:[#allocation2 + $0x34] sm:$0xf]
    %v83 = vld [vmem:[#allocation2 + $0x38] sm:$0xf]
    %v84 = vld [vmem:[#allocation2 + $0x3c] sm:$0xf]
    %v85 = vld [vmem:[#allocation5] sm:$0xf]
    %v86 = vld [vmem:[#allocation5 + $0x4] sm:$0xf]
    %v87 = vld [vmem:[#allocation5 + $0x8] sm:$0xf]
    %v88 = vld [vmem:[#allocation5 + $0xc] sm:$0xf]
    %v89 = vld [vmem:[#allocation5 + $0x10] sm:$0xf]
    %v90 = vld [vmem:[#allocation5 + $0x14] sm:$0xf]
    %v91 = vld [vmem:[#allocation5 + $0x18] sm:$0xf]
    %v92 = vld [vmem:[#allocation5 + $0x1c] sm:$0xf]
    %v93 = vld [vmem:[#allocation5 + $0x20] sm:$0xf]
    %v94 = vld [vmem:[#allocation5 + $0x24] sm:$0xf]
    %v95 = vld [vmem:[#allocation5 + $0x28] sm:$0xf]
    %v96 = vld [vmem:[#allocation5 + $0x2c] sm:$0xf]
    %v97 = vld [vmem:[#allocation5 + $0x30] sm:$0xf]
    %v98 = vld [vmem:[#allocation5 + $0x34] sm:$0xf]
    %v99 = vld [vmem:[#allocation5 + $0x38] sm:$0xf]
    %v100 = vld [vmem:[#allocation5 + $0x3c] sm:$0xf]
    %v101 = vld [vmem:[%s2] sm:$0x1]
    %v103 = vlaneseq
    %v104 = vshrl.u32 %v103, 7
    %v105 = vsub.s32 0, %v104
    %v106 = vrot.slane %v101, %v105
    %v124 = vunpack.c.l.b16 %v69
    %v125 = vunpack.c.l.b16 %v70
    %v126 = vunpack.c.l.b16 %v71
    %v127 = vunpack.c.l.b16 %v72
    %v128 = vunpack.c.l.b16 %v73
    %v129 = vunpack.c.l.b16 %v74
    %v130 = vunpack.c.l.b16 %v75
    %v131 = vunpack.c.l.b16 %v76
    %v132 = vunpack.c.l.b16 %v77
    %v133 = vunpack.c.l.b16 %v78
    %v134 = vunpack.c.l.b16 %v79
    %v135 = vunpack.c.l.b16 %v80
    %v136 = vunpack.c.l.b16 %v81
    %v137 = vunpack.c.l.b16 %v82
    %v138 = vunpack.c.l.b16 %v83
    %v139 = vunpack.c.l.b16 %v84
    %v140 = vpack.c.b16 %v125, %v124
    %v141 = vpack.c.b16 %v127, %v126
    %v142 = vpack.c.b16 %v129, %v128
    %v143 = vpack.c.b16 %v131, %v130
    %v144 = vpack.c.b16 %v133, %v132
    %v145 = vpack.c.b16 %v135, %v134
    %v146 = vpack.c.b16 %v137, %v136
    %v147 = vpack.c.b16 %v139, %v138
    %v172 = vunpack.c.l.b16 %v85
    %v173 = vunpack.c.l.b16 %v86
    %v174 = vunpack.c.l.b16 %v87
    %v175 = vunpack.c.l.b16 %v88
    %v176 = vunpack.c.l.b16 %v89
    %v177 = vunpack.c.l.b16 %v90
    %v178 = vunpack.c.l.b16 %v91
    %v179 = vunpack.c.l.b16 %v92
    %v180 = vunpack.c.l.b16 %v93
    %v181 = vunpack.c.l.b16 %v94
    %v182 = vunpack.c.l.b16 %v95
    %v183 = vunpack.c.l.b16 %v96
    %v184 = vunpack.c.l.b16 %v97
    %v185 = vunpack.c.l.b16 %v98
    %v186 = vunpack.c.l.b16 %v99
    %v187 = vunpack.c.l.b16 %v100
    %v188 = vpack.c.b16 %v173, %v172
    %v189 = vpack.c.b16 %v175, %v174
    %v190 = vpack.c.b16 %v177, %v176
    %v191 = vpack.c.b16 %v179, %v178
    %v192 = vpack.c.b16 %v181, %v180
    %v193 = vpack.c.b16 %v183, %v182
    %v194 = vpack.c.b16 %v185, %v184
    %v195 = vpack.c.b16 %v187, %v186
    %204 = vmatprep.subr.bf16.mxu0 0
    %205 = vmatpush1.bf16.msra.mxu0 %v188
    %206 = vmatprep.subr.bf16.mxu0 0
    %207 = vmatpush1.bf16.msra.mxu0 %v189
    %208 = vmatprep.subr.bf16.mxu0 0
    %209 = vmatpush1.bf16.msra.mxu0 %v190
    %210 = vmatprep.subr.bf16.mxu0 0
    %211 = vmatpush1.bf16.msra.mxu0 %v191
    %212 = vmatprep.subr.bf16.mxu0 0
    %213 = vmatpush1.bf16.msra.mxu0 %v192
    %214 = vmatprep.subr.bf16.mxu0 0
    %215 = vmatpush1.bf16.msra.mxu0 %v193
    %216 = vmatprep.subr.bf16.mxu0 0
    %217 = vmatpush1.bf16.msra.mxu0 %v194
    %218 = vmatprep.subr.bf16.mxu0 0
    %219 = vmatpush1.bf16.msra.mxu0 %v195
    %220 = vmatprep.subr.bf16.mxu0 0
    %221 = vmatpush1.bf16.msra.mxu0 0
    %222 = vmatprep.subr.bf16.mxu0 0
    %223 = vmatpush1.bf16.msra.mxu0 0
    %224 = vmatprep.subr.bf16.mxu0 0
    %225 = vmatpush1.bf16.msra.mxu0 0
    %226 = vmatprep.subr.bf16.mxu0 0
    %227 = vmatpush1.bf16.msra.mxu0 0
    %228 = vmatprep.subr.bf16.mxu0 0
    %229 = vmatpush1.bf16.msra.mxu0 0
    %230 = vmatprep.subr.bf16.mxu0 0
    %231 = vmatpush1.bf16.msra.mxu0 0
    %232 = vmatprep.subr.bf16.mxu0 0
    %233 = vmatpush1.bf16.msra.mxu0 0
    %234 = vmatprep.subr.bf16.mxu0 0
    %235 = vmatpush1.bf16.msra.mxu0 0
    %236 = vmatprep.mubr.bf16.mxu0 0
    %237 = vmatmul.mubr.bf16.gmra.mrb[0].mxu0 %v140
    %v238 = vpop.f32.mrb[0].mxu0
    %v239 = vadd.f32 %v106, %v238
    %v240 = vpop.f32.mrb[0].mxu0
    %v241 = vpop.f32.mrb[0].mxu0
    %v242 = vadd.f32 %v106, %v241
    %v243 = vpop.f32.mrb[0].mxu0
    %244 = vmatprep.mubr.bf16.mxu0 0
    %245 = vmatmul.mubr.bf16.gmra.mrb[0].mxu0 %v141
    %v246 = vpop.f32.mrb[0].mxu0
    %v247 = vadd.f32 %v106, %v246
    %v248 = vpop.f32.mrb[0].mxu0
    %v249 = vpop.f32.mrb[0].mxu0
    %v250 = vadd.f32 %v106, %v249
    %v251 = vpop.f32.mrb[0].mxu0
    %252 = vmatprep.mubr.bf16.mxu0 0
    %253 = vmatmul.mubr.bf16.gmra.mrb[0].mxu0 %v142
    %v254 = vpop.f32.mrb[0].mxu0
    %v255 = vadd.f32 %v106, %v254
    %v256 = vpop.f32.mrb[0].mxu0
    %v257 = vpop.f32.mrb[0].mxu0
    %v258 = vadd.f32 %v106, %v257
    %v259 = vpop.f32.mrb[0].mxu0
    %260 = vmatprep.mubr.bf16.mxu0 0
    %261 = vmatmul.mubr.bf16.gmra.mrb[0].mxu0 %v143
    %v262 = vpop.f32.mrb[0].mxu0
    %v263 = vadd.f32 %v106, %v262
    %v264 = vpop.f32.mrb[0].mxu0
    %v265 = vpop.f32.mrb[0].mxu0
    %v266 = vadd.f32 %v106, %v265
    %v267 = vpop.f32.mrb[0].mxu0
    %268 = vmatprep.mubr.bf16.mxu0 0
    %269 = vmatmul.mubr.bf16.gmra.mrb[0].mxu0 %v144
    %v270 = vpop.f32.mrb[0].mxu0
    %v271 = vadd.f32 %v106, %v270
    %v272 = vpop.f32.mrb[0].mxu0
    %v273 = vpop.f32.mrb[0].mxu0
    %v274 = vadd.f32 %v106, %v273
    %v275 = vpop.f32.mrb[0].mxu0
    %276 = vmatprep.mubr.bf16.mxu0 0
    %277 = vmatmul.mubr.bf16.gmra.mrb[0].mxu0 %v145
    %v278 = vpop.f32.mrb[0].mxu0
    %v279 = vadd.f32 %v106, %v278
    %v280 = vpop.f32.mrb[0].mxu0
    %v281 = vpop.f32.mrb[0].mxu0
    %v282 = vadd.f32 %v106, %v281
    %v283 = vpop.f32.mrb[0].mxu0
    %284 = vmatprep.mubr.bf16.mxu0 0
    %285 = vmatmul.mubr.bf16.gmra.mrb[0].mxu0 %v146
    %v286 = vpop.f32.mrb[0].mxu0
    %v287 = vadd.f32 %v106, %v286
    %v288 = vpop.f32.mrb[0].mxu0
    %v289 = vpop.f32.mrb[0].mxu0
    %v290 = vadd.f32 %v106, %v289
    %v291 = vpop.f32.mrb[0].mxu0
    %292 = vmatprep.mubr.bf16.mxu0 0
    %293 = vmatmul.mubr.bf16.gmra.mrb[0].mxu0 %v147
    %v294 = vpop.f32.mrb[0].mxu0
    %v295 = vadd.f32 %v106, %v294
    %v296 = vpop.f32.mrb[0].mxu0
    %v297 = vpop.f32.mrb[0].mxu0
    %v298 = vadd.f32 %v106, %v297
    %v299 = vpop.f32.mrb[0].mxu0
    %300 = vdwg.mxu0
    %v301 = vpack.c.bf16 %v242, %v239
    %v302 = vpack.c.bf16 %v250, %v247
    %v303 = vpack.c.bf16 %v258, %v255
    %v304 = vpack.c.bf16 %v266, %v263
    %v305 = vpack.c.bf16 %v274, %v271
    %v306 = vpack.c.bf16 %v282, %v279
    %v307 = vpack.c.bf16 %v290, %v287
    %v308 = vpack.c.bf16 %v298, %v295
    %v309 = vld [vmem:[#allocation7] sm:$0xf]
    %v310 = vld [vmem:[#allocation7 + $0x4] sm:$0xf]
    %v311 = vld [vmem:[#allocation7 + $0x8] sm:$0xf]
    %v312 = vld [vmem:[#allocation7 + $0xc] sm:$0xf]
    %v313 = vld [vmem:[#allocation7 + $0x10] sm:$0xf]
    %v314 = vld [vmem:[#allocation7 + $0x14] sm:$0xf]
    %v315 = vld [vmem:[#allocation7 + $0x18] sm:$0xf]
    %v316 = vld [vmem:[#allocation7 + $0x1c] sm:$0xf]
    %v317 = vld [vmem:[#allocation7 + $0x20] sm:$0xf]
    %v318 = vld [vmem:[#allocation7 + $0x24] sm:$0xf]
    %v319 = vld [vmem:[#allocation7 + $0x28] sm:$0xf]
    %v320 = vld [vmem:[#allocation7 + $0x2c] sm:$0xf]
    %v321 = vld [vmem:[#allocation7 + $0x30] sm:$0xf]
    %v322 = vld [vmem:[#allocation7 + $0x34] sm:$0xf]
    %v323 = vld [vmem:[#allocation7 + $0x38] sm:$0xf]
    %v324 = vld [vmem:[#allocation7 + $0x3c] sm:$0xf]
    %v325 = vld [vmem:[%s4] sm:$0x1]
    %v327 = vlaneseq
    %v328 = vshrl.u32 %v327, 7
    %v329 = vsub.s32 0, %v328
    %v330 = vrot.slane %v325, %v329
    %v348 = vunpack.c.l.b16 %v309
    %v349 = vunpack.c.l.b16 %v310
    %v350 = vunpack.c.l.b16 %v311
    %v351 = vunpack.c.l.b16 %v312
    %v352 = vunpack.c.l.b16 %v313
    %v353 = vunpack.c.l.b16 %v314
    %v354 = vunpack.c.l.b16 %v315
    %v355 = vunpack.c.l.b16 %v316
    %v356 = vunpack.c.l.b16 %v317
    %v357 = vunpack.c.l.b16 %v318
    %v358 = vunpack.c.l.b16 %v319
    %v359 = vunpack.c.l.b16 %v320
    %v360 = vunpack.c.l.b16 %v321
    %v361 = vunpack.c.l.b16 %v322
    %v362 = vunpack.c.l.b16 %v323
    %v363 = vunpack.c.l.b16 %v324
    %v364 = vpack.c.b16 %v349, %v348
    %v365 = vpack.c.b16 %v351, %v350
    %v366 = vpack.c.b16 %v353, %v352
    %v367 = vpack.c.b16 %v355, %v354
    %v368 = vpack.c.b16 %v357, %v356
    %v369 = vpack.c.b16 %v359, %v358
    %v370 = vpack.c.b16 %v361, %v360
    %v371 = vpack.c.b16 %v363, %v362
    %380 = vmatprep.subr.bf16.mxu0 0
    %381 = vmatpush1.bf16.msra.mxu0 %v364
    %382 = vmatprep.subr.bf16.mxu0 0
    %383 = vmatpush1.bf16.msra.mxu0 %v365
    %384 = vmatprep.subr.bf16.mxu0 0
    %385 = vmatpush1.bf16.msra.mxu0 %v366
    %386 = vmatprep.subr.bf16.mxu0 0
    %387 = vmatpush1.bf16.msra.mxu0 %v367
    %388 = vmatprep.subr.bf16.mxu0 0
    %389 = vmatpush1.bf16.msra.mxu0 %v368
    %390 = vmatprep.subr.bf16.mxu0 0
    %391 = vmatpush1.bf16.msra.mxu0 %v369
    %392 = vmatprep.subr.bf16.mxu0 0
    %393 = vmatpush1.bf16.msra.mxu0 %v370
    %394 = vmatprep.subr.bf16.mxu0 0
    %395 = vmatpush1.bf16.msra.mxu0 %v371
    %396 = vmatprep.subr.bf16.mxu0 0
    %397 = vmatpush1.bf16.msra.mxu0 0
    %398 = vmatprep.subr.bf16.mxu0 0
    %399 = vmatpush1.bf16.msra.mxu0 0
    %400 = vmatprep.subr.bf16.mxu0 0
    %401 = vmatpush1.bf16.msra.mxu0 0
    %402 = vmatprep.subr.bf16.mxu0 0
    %403 = vmatpush1.bf16.msra.mxu0 0
    %404 = vmatprep.subr.bf16.mxu0 0
    %405 = vmatpush1.bf16.msra.mxu0 0
    %406 = vmatprep.subr.bf16.mxu0 0
    %407 = vmatpush1.bf16.msra.mxu0 0
    %408 = vmatprep.subr.bf16.mxu0 0
    %409 = vmatpush1.bf16.msra.mxu0 0
    %410 = vmatprep.subr.bf16.mxu0 0
    %411 = vmatpush1.bf16.msra.mxu0 0
    %412 = vmatprep.mubr.bf16.mxu0 0
    %413 = vmatmul.mubr.bf16.gmra.mrb[0].mxu0 %v301
    %v414 = vpop.f32.mrb[0].mxu0
    %v415 = vadd.f32 %v330, %v414
    %v416 = vpop.f32.mrb[0].mxu0
    %v417 = vpop.f32.mrb[0].mxu0
    %v418 = vadd.f32 %v330, %v417
    %v419 = vpop.f32.mrb[0].mxu0
    %420 = vmatprep.mubr.bf16.mxu0 0
    %421 = vmatmul.mubr.bf16.gmra.mrb[0].mxu0 %v302
    %v422 = vpop.f32.mrb[0].mxu0
    %v423 = vadd.f32 %v330, %v422
    %v424 = vpop.f32.mrb[0].mxu0
    %v425 = vpop.f32.mrb[0].mxu0
    %v426 = vadd.f32 %v330, %v425
    %v427 = vpop.f32.mrb[0].mxu0
    %428 = vmatprep.mubr.bf16.mxu0 0
    %429 = vmatmul.mubr.bf16.gmra.mrb[0].mxu0 %v303
    %v430 = vpop.f32.mrb[0].mxu0
    %v431 = vadd.f32 %v330, %v430
    %v432 = vpop.f32.mrb[0].mxu0
    %v433 = vpop.f32.mrb[0].mxu0
    %v434 = vadd.f32 %v330, %v433
    %v435 = vpop.f32.mrb[0].mxu0
    %436 = vmatprep.mubr.bf16.mxu0 0
    %437 = vmatmul.mubr.bf16.gmra.mrb[0].mxu0 %v304
    %v438 = vpop.f32.mrb[0].mxu0
    %v439 = vadd.f32 %v330, %v438
    %v440 = vpop.f32.mrb[0].mxu0
    %v441 = vpop.f32.mrb[0].mxu0
    %v442 = vadd.f32 %v330, %v441
    %v443 = vpop.f32.mrb[0].mxu0
    %444 = vmatprep.mubr.bf16.mxu0 0
    %445 = vmatmul.mubr.bf16.gmra.mrb[0].mxu0 %v305
    %v446 = vpop.f32.mrb[0].mxu0
    %v447 = vadd.f32 %v330, %v446
    %v448 = vpop.f32.mrb[0].mxu0
    %v449 = vpop.f32.mrb[0].mxu0
    %v450 = vadd.f32 %v330, %v449
    %v451 = vpop.f32.mrb[0].mxu0
    %452 = vmatprep.mubr.bf16.mxu0 0
    %453 = vmatmul.mubr.bf16.gmra.mrb[0].mxu0 %v306
    %v454 = vpop.f32.mrb[0].mxu0
    %v455 = vadd.f32 %v330, %v454
    %v456 = vpop.f32.mrb[0].mxu0
    %v457 = vpop.f32.mrb[0].mxu0
    %v458 = vadd.f32 %v330, %v457
    %v459 = vpop.f32.mrb[0].mxu0
    %460 = vmatprep.mubr.bf16.mxu0 0
    %461 = vmatmul.mubr.bf16.gmra.mrb[0].mxu0 %v307
    %v462 = vpop.f32.mrb[0].mxu0
    %v463 = vadd.f32 %v330, %v462
    %v464 = vpop.f32.mrb[0].mxu0
    %v465 = vpop.f32.mrb[0].mxu0
    %v466 = vadd.f32 %v330, %v465
    %v467 = vpop.f32.mrb[0].mxu0
    %468 = vmatprep.mubr.bf16.mxu0 0
    %469 = vmatmul.mubr.bf16.gmra.mrb[0].mxu0 %v308
    %v470 = vpop.f32.mrb[0].mxu0
    %v471 = vadd.f32 %v330, %v470
    %v472 = vpop.f32.mrb[0].mxu0
    %v473 = vpop.f32.mrb[0].mxu0
    %v474 = vadd.f32 %v330, %v473
    %v475 = vpop.f32.mrb[0].mxu0
    %476 = vdwg.mxu0
    %v477 = vld [vmem:[%s5] sm:$0xf]
    %v478 = vld [vmem:[%s5 + $0x4] sm:$0xf]
    %v479 = vpack.c.bf16 %v418, %v415
    %v480 = vpack.c.bf16 %v426, %v423
    %v481 = vpack.c.bf16 %v434, %v431
    %v482 = vpack.c.bf16 %v442, %v439
    %v483 = vpack.c.bf16 %v450, %v447
    %v484 = vpack.c.bf16 %v458, %v455
    %v485 = vpack.c.bf16 %v466, %v463
    %v486 = vpack.c.bf16 %v474, %v471
    %v487 = vld [vmem:[%s6] sm:$0xff]
    %v488 = vld [vmem:[%s6 + $0x8] sm:$0xff]
    %490 = vset.pattern.permute.xlu0 0
    %491 = vperm.xlu0 %490, %v487
    %v492 = vpop.permute.xlu0 %491
    %495 = vset.pattern.permute.xlu0 0
    %496 = vperm.xlu0 %495, %v488
    %v497 = vpop.permute.xlu0 %496
    %v501 = vunpack.c.l.b16 %v477
    %v502 = vunpack.c.l.b16 %v478
    %v503 = vpack.c.b16 %v502, %v501
    %505 = vmatprep.subr.bf16.mxu0 0
    %506 = vmatpush1.bf16.xpose.msra.mxu0 %v479
    %507 = vmatprep.subr.bf16.mxu0 0
    %508 = vmatpush1.bf16.xpose.msra.mxu0 %v480
    %509 = vmatprep.subr.bf16.mxu0 0
    %510 = vmatpush1.bf16.xpose.msra.mxu0 %v481
    %511 = vmatprep.subr.bf16.mxu0 0
    %512 = vmatpush1.bf16.xpose.msra.mxu0 %v482
    %513 = vmatprep.subr.bf16.mxu0 0
    %514 = vmatpush1.bf16.xpose.msra.mxu0 %v483
    %515 = vmatprep.subr.bf16.mxu0 0
    %516 = vmatpush1.bf16.xpose.msra.mxu0 %v484
    %517 = vmatprep.subr.bf16.mxu0 0
    %518 = vmatpush1.bf16.xpose.msra.mxu0 %v485
    %519 = vmatprep.subr.bf16.mxu0 0
    %520 = vmatpush1.bf16.xpose.msra.mxu0 %v486
    %521 = vmatprep.subr.bf16.mxu0 0
    %522 = vmatpush1.bf16.xpose.msra.mxu0 0
    %523 = vmatprep.subr.bf16.mxu0 0
    %524 = vmatpush1.bf16.xpose.msra.mxu0 0
    %525 = vmatprep.subr.bf16.mxu0 0
    %526 = vmatpush1.bf16.xpose.msra.mxu0 0
    %527 = vmatprep.subr.bf16.mxu0 0
    %528 = vmatpush1.bf16.xpose.msra.mxu0 0
    %529 = vmatprep.subr.bf16.mxu0 0
    %530 = vmatpush1.bf16.xpose.msra.mxu0 0
    %531 = vmatprep.subr.bf16.mxu0 0
    %532 = vmatpush1.bf16.xpose.msra.mxu0 0
    %533 = vmatprep.subr.bf16.mxu0 0
    %534 = vmatpush1.bf16.xpose.msra.mxu0 0
    %535 = vmatprep.subr.bf16.mxu0 0
    %536 = vmatpush1.bf16.xpose.msra.mxu0 0
    %537 = vmatprep.mubr.bf16.mxu0 0
    %538 = vmatmul.mubr.bf16.gmra.mrb[0].mxu0 %v503
    %v539 = vpop.f32.mrb[0].mxu0
    %v540 = vadd.f32 %v492, %v539
    %v541 = vpop.f32.mrb[0].mxu0
    %v542 = vpop.f32.mrb[0].mxu0
    %v543 = vadd.f32 %v497, %v542
    %v544 = vpop.f32.mrb[0].mxu0
    %545 = vdwg.mxu0
    %546 = vst [vmem:[#allocation8] sm:$0xff] %v540
    %547 = vst [vmem:[#allocation8 + $0x8] sm:$0xff] %v543
    // Predicated region
    $region42: #{tpu_custom_call.1} parent=1 // pred_check
      _
    $region43: #{tpu_custom_call.1} parent=1 // pred_check_branch
      %549 = sbr.rel (0) target = $region45
    $region44: #{tpu_custom_call.1} parent=1 // pred_region
      %s551 = ssub.s32 256, 256
      %552 = vsyncadd [#allocation4], %s551
      %s553 = sshll.u32 [#allocation8], 4
      %s554 = int_to_ptr.vmem [resolvable:$true] %s553
      %559 = dma.vmem_to_hbm [thread:$0]  %s554, 256, %s7, [#allocation4], 128, 128, 8
    $region45: #{tpu_custom_call.1} parent=1 // pred_fallthru
      _
    // Predicated region
    $region46: #{tpu_custom_call.1} parent=1 // pred_check
      _
    $region47: #{tpu_custom_call.1} parent=1 // pred_check_branch
      %561 = sbr.rel (0) target = $region49
    $region48: #{tpu_custom_call.1} parent=1 // pred_region
      %562 = dma.done [#allocation4], 256
    $region49: #{tpu_custom_call.1} parent=1 // pred_fallthru
      _
    %563 = vsyncpa [#allocation3], 1
    %564 = vsyncpa [#allocation6], 1
    %565 = vsyncpa [#allocation4], 1

</llo_original>
